<compile_context>
chip_gen: v7x
topology: tpu7x:2x2x1
jax: 0.10.0
libtpu: 0.0.40
codegen_flags: <defaults>
</compile_context>

<pallas_src>
import functools
import numpy as np
import jax
import jax.numpy as jnp
from jax.experimental import pallas as pl
from jax.experimental.pallas import tpu as pltpu


# ----------------------------------- Pallas kernel ---------------------------------------

def _attention_kernel(gx_ref, w_ref, misc_ref, o_ref, *, cg):
    """AttentionBlock forward on lane-dense (C, N) slabs.

    gx_ref   : (F_g + F_l, N)  stacked [g ; x]; channels on sublanes, N = B*H*W on lanes
    w_ref    : (F_int, F_g + F_l)  fused, BN-folded [W_g | W_x] 1x1-conv weights
    misc_ref : (F_int, 3) packed small params:
                 col 0 = fused bias (b_g + b_x, BN-folded)
                 col 1 = psi weight (BN-folded)
                 col 2 = psi bias (row 0, BN-folded)
    o_ref    : (F_l, N)  output  x * psi   (lane-dense last dim)
    """
    gx = gx_ref[...]                                   # (Ctot, N) f32
    w = w_ref[...]                                     # (F_int, Ctot)
    misc = misc_ref[...]                               # (F_int, 3)
    bias = misc[:, 0:1]                                # (F_int, 1)
    wp = misc[:, 1:2]                                  # (F_int, 1)
    bp = misc[0:1, 2:3]                                # (1, 1)

    # W_g(g) + W_x(x): one lane-dense MXU matmul (BN + biases pre-folded).
    a = jnp.dot(w, gx, preferred_element_type=jnp.float32) + bias     # (F_int, N)
    a = jnp.maximum(a, 0.0)                                           # ReLU

    # psi: 1x1 conv (F_int -> 1) + BN + sigmoid, on VPU/EUP (no (N,1) matmul output).
    psi = jax.nn.sigmoid(jnp.sum(a * wp, axis=0, keepdims=True) + bp)  # (1, N)

    x = gx[cg:, :]                                     # (F_l, N) static sublane slice
    o_ref[...] = (x * psi).astype(o_ref.dtype)


# --------------------------------------- wrapper -----------------------------------------

def attention_block_forward(g_nchw, x_nchw, folded):
    """g, x in PyTorch NCHW; returns x * psi in NCHW."""
    B, Cg, H, W = g_nchw.shape
    _, Cx, _, _ = x_nchw.shape
    N = B * H * W

    # NCHW -> (C, B*H*W): channels on sublanes, batch*spatial lane-dense.
    g2 = jnp.transpose(g_nchw, (1, 0, 2, 3)).reshape(Cg, N).astype(jnp.float32)
    x2 = jnp.transpose(x_nchw, (1, 0, 2, 3)).reshape(Cx, N).astype(jnp.float32)
    gx = jnp.concatenate([g2, x2], axis=0)             # (Cg+Cx, N)

    wfused = folded['w']                               # (F_int, Cg+Cx)
    misc = folded['misc']                              # (F_int, 3)

    kernel = functools.partial(_attention_kernel, cg=Cg)

    def full_spec(shape):
        nd = len(shape)
        return pl.BlockSpec(tuple(shape), lambda i, nd=nd: (0,) * nd)

    out = pl.pallas_call(
        kernel,
        out_shape=jax.ShapeDtypeStruct((Cx, N), jnp.float32),
        grid=(1,),                                     # batch folded into lanes
        in_specs=[full_spec(gx.shape), full_spec(wfused.shape), full_spec(misc.shape)],
        out_specs=full_spec((Cx, N)),
        compiler_params=pltpu.CompilerParams(dimension_semantics=("arbitrary",)),
    )(gx, wfused, misc)

    # (Cx, B*H*W) -> NCHW
    return jnp.transpose(out.reshape(Cx, B, H, W), (1, 0, 2, 3))


# --------------------------- parameter construction & folding ----------------------------

def init_raw_params(key, f_g, f_l, f_int):
    """PyTorch-style raw parameters: 1x1 conv weights/biases + BatchNorm stats."""
    keys = iter(jax.random.split(key, 20))

    def conv1x1(cout, cin):
        bound = 1.0 / np.sqrt(cin)
        w = jax.random.uniform(next(keys), (cout, cin), jnp.float32, -bound, bound)
        b = jax.random.uniform(next(keys), (cout,), jnp.float32, -bound, bound)
        return w, b

    def bn(c, eps=1e-5):
        gamma = 1.0 + 0.1 * jax.random.normal(next(keys), (c,), jnp.float32)
        beta = 0.1 * jax.random.normal(next(keys), (c,), jnp.float32)
        mean = 0.1 * jax.random.normal(next(keys), (c,), jnp.float32)
        var = 1.0 + 0.1 * jnp.abs(jax.random.normal(next(keys), (c,), jnp.float32))
        scale = gamma / jnp.sqrt(var + eps)
        shift = beta - mean * scale
        return scale, shift

    p = {}
    p['wg'], p['bg'] = conv1x1(f_int, f_g)   # W_g : 1x1 conv (F_g -> F_int)
    p['sg'], p['tg'] = bn(f_int)
    p['wx'], p['bx'] = conv1x1(f_int, f_l)   # W_x : 1x1 conv (F_l -> F_int)
    p['sx'], p['tx'] = bn(f_int)
    p['wp'], p['bp'] = conv1x1(1, f_int)     # psi : 1x1 conv (F_int -> 1)
    p['sp'], p['tp'] = bn(1)
    return p


def fold_params(raw):
    """Fold BN(eval) + biases into weights; pack the small vectors into one array."""
    wg = raw['sg'][:, None] * raw['wg']                       # (F_int, F_g)
    wx = raw['sx'][:, None] * raw['wx']                       # (F_int, F_l)
    wfused = jnp.concatenate([wg, wx], axis=1)                # (F_int, F_g+F_l)
    bias = (raw['sg'] * raw['bg'] + raw['tg']
            + raw['sx'] * raw['bx'] + raw['tx'])              # (F_int,)
    wp = raw['sp'][0] * raw['wp'][0]                          # (F_int,)
    bp = raw['sp'][0] * raw['bp'][0] + raw['tp'][0]           # scalar
    f_int = wg.shape[0]
    misc = jnp.stack([bias, wp, jnp.full((f_int,), bp, jnp.float32)], axis=1)  # (F_int, 3)
    return {'w': wfused, 'misc': misc}


# --------------------------------- pure-JAX reference ------------------------------------

def ref_forward(g, x, raw):
    """Unfolded NCHW reference matching the PyTorch AttentionBlock (eval BN)."""
    def conv1x1_bn(inp, w, b, s, t):
        y = jnp.einsum('oc,bchw->bohw', w, inp) + b[None, :, None, None]
        return y * s[None, :, None, None] + t[None, :, None, None]

    g1 = conv1x1_bn(g, raw['wg'], raw['bg'], raw['sg'], raw['tg'])
    x1 = conv1x1_bn(x, raw['wx'], raw['bx'], raw['sx'], raw['tx'])
    psi = jax.nn.relu(g1 + x1)
    psi = jax.nn.sigmoid(conv1x1_bn(psi, raw['wp'], raw['bp'], raw['sp'], raw['tp']))
    return x * psi


# ------------------------------------------ main -----------------------------------------

if __name__ == "__main__":
    key = jax.random.PRNGKey(0)
    B, H, W = 2, 16, 16
    F_g, F_l, F_int = 4, 4, 2

    kg, kx, kp = jax.random.split(key, 3)
    g = jax.random.normal(kg, (B, F_g, H, W), jnp.float32)   # gating signal (NCHW)
    x = jax.random.normal(kx, (B, F_l, H, W), jnp.float32)   # skip-connection features
    raw = init_raw_params(kp, F_g, F_l, F_int)
    folded = fold_params(raw)

    out = attention_block_forward(g, x, folded)
    out = jax.block_until_ready(out)

    assert out.shape == (B, F_l, H, W)
    ref = ref_forward(g, x, raw)
    assert bool(jnp.allclose(out, ref, rtol=1e-3, atol=1e-4))
    print("KERNEL_OK")
</pallas_src>

<mosaic_0001>
module attributes {stable_mosaic.version = 11 : i64} {
  func.func @_attention_kernel(%arg0: i32, %arg1: memref<8x512xf32, #tpu.memory_space<vmem>>, %arg2: memref<2x8xf32, #tpu.memory_space<vmem>>, %arg3: memref<2x3xf32, #tpu.memory_space<vmem>>, %arg4: memref<4x512xf32, #tpu.memory_space<vmem>>) attributes {dimension_semantics = [#tpu.dimension_semantics<arbitrary>], iteration_bounds = array<i64: 1>, scalar_prefetch = 0 : i64, scratch_operands = 0 : i64, tpu.core_type = #tpu.core_type<tc>, window_params = [{pipeline_mode = #tpu.pipeline_mode<synchronous>, transform_indices = @transform_0, window_bounds = array<i64: 8, 512>}, {pipeline_mode = #tpu.pipeline_mode<synchronous>, transform_indices = @transform_1, window_bounds = array<i64: 2, 8>}, {pipeline_mode = #tpu.pipeline_mode<synchronous>, transform_indices = @transform_2, window_bounds = array<i64: 2, 3>}, {pipeline_mode = #tpu.pipeline_mode<synchronous>, transform_indices = @transform_3, window_bounds = array<i64: 4, 512>}]} {
    %c0 = arith.constant 0 : index
    %c0_0 = arith.constant 0 : index
    %0 = vector.load %arg1[%c0, %c0_0] : memref<8x512xf32, #tpu.memory_space<vmem>>, vector<8x512xf32>
    %c0_1 = arith.constant 0 : index
    %c0_2 = arith.constant 0 : index
    %1 = vector.load %arg2[%c0_1, %c0_2] : memref<2x8xf32, #tpu.memory_space<vmem>>, vector<2x8xf32>
    %c0_3 = arith.constant 0 : index
    %c0_4 = arith.constant 0 : index
    %2 = vector.load %arg3[%c0_3, %c0_4] : memref<2x3xf32, #tpu.memory_space<vmem>>, vector<2x3xf32>
    %3 = vector.extract_strided_slice %2 {offsets = [0, 0], sizes = [2, 1], strides = [1, 1]} : vector<2x3xf32> to vector<2x1xf32>
    %4 = vector.extract_strided_slice %2 {offsets = [0, 1], sizes = [2, 1], strides = [1, 1]} : vector<2x3xf32> to vector<2x1xf32>
    %5 = vector.extract_strided_slice %2 {offsets = [0, 2], sizes = [1, 1], strides = [1, 1]} : vector<2x3xf32> to vector<1x1xf32>
    %cst = arith.constant dense<0.000000e+00> : vector<2x512xf32>
    %6 = tpu.matmul %1, %0, %cst {dimension_numbers = #tpu.dot_dimension_numbers<[1], [0], [0], [1], [0, 0, 1, 1], [], []>} : vector<2x8xf32>, vector<8x512xf32>, vector<2x512xf32> -> vector<2x512xf32>
    %7 = vector.broadcast %3 : vector<2x1xf32> to vector<2x512xf32>
    %8 = arith.addf %6, %7 : vector<2x512xf32>
    %cst_5 = arith.constant 0.000000e+00 : f32
    %9 = vector.broadcast %cst_5 : f32 to vector<2x512xf32>
    %10 = arith.maximumf %8, %9 : vector<2x512xf32>
    %11 = vector.broadcast %4 : vector<2x1xf32> to vector<2x512xf32>
    %12 = arith.mulf %10, %11 : vector<2x512xf32>
    %cst_6 = arith.constant dense<0.000000e+00> : vector<512xf32>
    %13 = vector.multi_reduction <add>, %12, %cst_6 [0] : vector<2x512xf32> to vector<512xf32>
    %14 = vector.shape_cast %13 : vector<512xf32> to vector<1x512xf32>
    %15 = vector.broadcast %5 : vector<1x1xf32> to vector<1x512xf32>
    %16 = arith.addf %14, %15 : vector<1x512xf32>
    %17 = arith.negf %16 : vector<1x512xf32>
    %18 = math.exp %17 : vector<1x512xf32>
    %cst_7 = arith.constant 1.000000e+00 : f32
    %19 = vector.broadcast %cst_7 : f32 to vector<1x512xf32>
    %20 = arith.addf %19, %18 : vector<1x512xf32>
    %21 = arith.divf %19, %20 : vector<1x512xf32>
    %22 = vector.extract_strided_slice %0 {offsets = [4, 0], sizes = [4, 512], strides = [1, 1]} : vector<8x512xf32> to vector<4x512xf32>
    %23 = vector.broadcast %21 : vector<1x512xf32> to vector<4x512xf32>
    %24 = arith.mulf %22, %23 : vector<4x512xf32>
    %c0_8 = arith.constant 0 : index
    %c0_9 = arith.constant 0 : index
    %25 = vector.load %arg4[%c0_8, %c0_9] : memref<4x512xf32, #tpu.memory_space<vmem>>, vector<4x512xf32>
    tpu.vector_store %arg4[%c0_8, %c0_9], %24 {strides = array<i32>} : memref<4x512xf32, #tpu.memory_space<vmem>>, vector<4x512xf32>,
    return
  }
  func.func @transform_0(%arg0: i32) -> (i32, i32) {
    %c0_i32 = arith.constant 0 : i32
    %c0_i32_0 = arith.constant 0 : i32
    %c0_i32_1 = arith.constant 0 : i32
    return %c0_i32, %c0_i32_0 : i32, i32
  }
  func.func @transform_1(%arg0: i32) -> (i32, i32) {
    %c0_i32 = arith.constant 0 : i32
    %c0_i32_0 = arith.constant 0 : i32
    %c0_i32_1 = arith.constant 0 : i32
    return %c0_i32, %c0_i32_0 : i32, i32
  }
  func.func @transform_2(%arg0: i32) -> (i32, i32) {
    %c0_i32 = arith.constant 0 : i32
    %c0_i32_0 = arith.constant 0 : i32
    %c0_i32_1 = arith.constant 0 : i32
    return %c0_i32, %c0_i32_0 : i32, i32
  }
  func.func @transform_3(%arg0: i32) -> (i32, i32) {
    %c0_i32 = arith.constant 0 : i32
    %c0_i32_0 = arith.constant 0 : i32
    %c0_i32_1 = arith.constant 0 : i32
    return %c0_i32, %c0_i32_0 : i32, i32
  }
}

</mosaic_0001>

<llo_original>
// kernel: tpu_custom_call.1
$region0: #{tpu_custom_call.1}
  #allocation0 [shape = 'u32[]', space=smem, size = 0x4, offset = 0x4, fixed_abs, tag = 'smem constant byte address 0x4 - core index']
  #allocation1 [shape = 'u32[144,128]{1,0:T(1,128)}', space=vmem, size = 0x12000, scoped, tag = 'internal scratch']
  %s0 = inlined_call_operand.hbm [shape: f32[8,512], index: 0, kind: input, shape index: {}]
  %s1 = inlined_call_operand.vmem [shape: f32[2,8], index: 1, kind: input, shape index: {}]
  %s2 = inlined_call_operand.vmem [shape: f32[2,3], index: 2, kind: input, shape index: {}]
  %s3 = inlined_call_operand.hbm [shape: f32[4,512], index: 3, kind: output, shape index: {}]
  %s4 = sld [smem:[#allocation0]]
  $region26: #{tpu_custom_call.1} parent=0
    _
  %s6 = ssub.s32 1, %s4
  %s7 = scalar_select 0, %s6, %s4
  $region1: #{tpu_custom_call.1} parent=0
    #allocation2 [shape = 'u8[16384]{0}', space=vmem, size = 0x4000, scoped, tag = 'input window, operand 0, single buffered']
    #allocation3 [shape = 's32[1]{0}', space=sflag, size = 0x4, scoped, tag = 'scoped memory for tpu_custom_call.1']
    #allocation4 [shape = 's32[1]{0}', space=sflag, size = 0x4, scoped, tag = 'scoped memory for tpu_custom_call.1']
    #allocation5 [shape = 'u8[8192]{0}', space=vmem, size = 0x2000, scoped, tag = 'output window, operand 0, single buffered']
    %8 = vsyncpa [#allocation3], 0
    %9 = vsyncpa [#allocation4], 0
    // Predicated region
    $region2: #{tpu_custom_call.1} parent=1 // pred_check
      _
    $region3: #{tpu_custom_call.1} parent=1 // pred_check_branch
      %11 = sbr.rel (0) target = $region5
    $region4: #{tpu_custom_call.1} parent=1 // pred_region
      %s13 = ssub.s32 512, 512
      %14 = vsyncadd [#allocation3], %s13
      %s16 = sshll.u32 [#allocation2], 4
      %s17 = int_to_ptr.vmem [resolvable:$true] %s16
      %19 = dma.hbm_to_vmem [thread:$0]  %s0, 512, %s17, [#allocation3]
    $region5: #{tpu_custom_call.1} parent=1 // pred_fallthru
      _
    // Predicated region
    $region6: #{tpu_custom_call.1} parent=1 // pred_check
      _
    $region7: #{tpu_custom_call.1} parent=1 // pred_check_branch
      %21 = sbr.rel (0) target = $region9
    $region8: #{tpu_custom_call.1} parent=1 // pred_region
      _
    $region9: #{tpu_custom_call.1} parent=1 // pred_fallthru
      _
    // Predicated region
    $region10: #{tpu_custom_call.1} parent=1 // pred_check
      _
    $region11: #{tpu_custom_call.1} parent=1 // pred_check_branch
      %23 = sbr.rel (0) target = $region13
    $region12: #{tpu_custom_call.1} parent=1 // pred_region
      _
    $region13: #{tpu_custom_call.1} parent=1 // pred_fallthru
      _
    // Predicated region
    $region14: #{tpu_custom_call.1} parent=1 // pred_check
      _
    $region15: #{tpu_custom_call.1} parent=1 // pred_check_branch
      %25 = sbr.rel (0) target = $region17
    $region16: #{tpu_custom_call.1} parent=1 // pred_region
      %26 = dma.done [#allocation3], 512
    $region17: #{tpu_custom_call.1} parent=1 // pred_fallthru
      _
    %v27 = vld [vmem:[#allocation2] sm:$0xff]
    %v28 = vld [vmem:[#allocation2 + $0x8] sm:$0xff]
    %v29 = vld [vmem:[#allocation2 + $0x10] sm:$0xff]
    %v30 = vld [vmem:[#allocation2 + $0x18] sm:$0xff]
    %v31 = vld [vmem:[%s1] sm:$0x3]
    %v32 = vld [vmem:[%s2] sm:$0x3]
    %34 = vset.pattern.permute.xlu0 0
    %35 = vperm.xlu0 %34, %v32
    %v36 = vpop.permute.xlu0 %35
    %vm38 = vcmask 64512
    %v40 = vsel %vm38, %v31, 0
    %42 = vmatprep.subr.mxu0 %v28
    %43 = vmatpush1.msra.mxu0 %v27
    %44 = vmatprep.subr.mxu0 0.0
    %45 = vmatpush1.msra.mxu0 0.0
    %46 = vmatprep.subr.mxu0 0.0
    %47 = vmatpush1.msra.mxu0 0.0
    %48 = vmatprep.subr.mxu0 0.0
    %49 = vmatpush1.msra.mxu0 0.0
    %50 = vmatprep.subr.mxu0 0.0
    %51 = vmatpush1.msra.mxu0 0.0
    %52 = vmatprep.subr.mxu0 0.0
    %53 = vmatpush1.msra.mxu0 0.0
    %54 = vmatprep.subr.mxu0 0.0
    %55 = vmatpush1.msra.mxu0 0.0
    %56 = vmatprep.subr.mxu0 0.0
    %57 = vmatpush1.msra.mxu0 0.0
    %58 = vmatprep.subr.mxu0 0.0
    %59 = vmatpush1.msra.mxu0 0.0
    %60 = vmatprep.subr.mxu0 0.0
    %61 = vmatpush1.msra.mxu0 0.0
    %62 = vmatprep.subr.mxu0 0.0
    %63 = vmatpush1.msra.mxu0 0.0
    %64 = vmatprep.subr.mxu0 0.0
    %65 = vmatpush1.msra.mxu0 0.0
    %66 = vmatprep.subr.mxu0 0.0
    %67 = vmatpush1.msra.mxu0 0.0
    %68 = vmatprep.subr.mxu0 0.0
    %69 = vmatpush1.msra.mxu0 0.0
    %70 = vmatprep.subr.mxu0 0.0
    %71 = vmatpush1.msra.mxu0 0.0
    %72 = vmatprep.subr.mxu0 0.0
    %73 = vmatpush1.msra.mxu0 0.0
    %74 = vmatprep.subr.mxu0 0.0
    %75 = vmatpush1.msra.mxu0 0.0
    %76 = vmatprep.subr.mxu0 0.0
    %77 = vmatpush1.msra.mxu0 0.0
    %78 = vmatprep.subr.mxu0 0.0
    %79 = vmatpush1.msra.mxu0 0.0
    %80 = vmatprep.subr.mxu0 0.0
    %81 = vmatpush1.msra.mxu0 0.0
    %82 = vmatprep.subr.mxu0 0.0
    %83 = vmatpush1.msra.mxu0 0.0
    %84 = vmatprep.subr.mxu0 0.0
    %85 = vmatpush1.msra.mxu0 0.0
    %86 = vmatprep.subr.mxu0 0.0
    %87 = vmatpush1.msra.mxu0 0.0
    %88 = vmatprep.subr.mxu0 0.0
    %89 = vmatpush1.msra.mxu0 0.0
    %90 = vmatprep.subr.mxu0 0.0
    %91 = vmatpush1.msra.mxu0 0.0
    %92 = vmatprep.subr.mxu0 0.0
    %93 = vmatpush1.msra.mxu0 0.0
    %94 = vmatprep.subr.mxu0 0.0
    %95 = vmatpush1.msra.mxu0 0.0
    %96 = vmatprep.subr.mxu0 0.0
    %97 = vmatpush1.msra.mxu0 0.0
    %98 = vmatprep.subr.mxu0 0.0
    %99 = vmatpush1.msra.mxu0 0.0
    %100 = vmatprep.subr.mxu0 0.0
    %101 = vmatpush1.msra.mxu0 0.0
    %102 = vmatprep.subr.mxu0 0.0
    %103 = vmatpush1.msra.mxu0 0.0
    %104 = vmatprep.subr.mxu0 0.0
    %105 = vmatpush1.msra.mxu0 0.0
    %106 = vmatprep.mubr.f32.mxu0 0.0
    %107 = vmatmul.mubr.f32.gmra.mrb[0].mxu0 %v40
    %v108 = vpop.f32.mrb[0].mxu0
    %v109 = vadd.f32 %v36, %v108
    %v110 = vpop.f32.mrb[0].mxu0
    %v111 = vadd.f32 %v36, %v110
    %112 = vdwg.mxu0
    %113 = vmatprep.subr.mxu0 %v30
    %114 = vmatpush1.msra.mxu0 %v29
    %115 = vmatprep.subr.mxu0 0.0
    %116 = vmatpush1.msra.mxu0 0.0
    %117 = vmatprep.subr.mxu0 0.0
    %118 = vmatpush1.msra.mxu0 0.0
    %119 = vmatprep.subr.mxu0 0.0
    %120 = vmatpush1.msra.mxu0 0.0
    %121 = vmatprep.subr.mxu0 0.0
    %122 = vmatpush1.msra.mxu0 0.0
    %123 = vmatprep.subr.mxu0 0.0
    %124 = vmatpush1.msra.mxu0 0.0
    %125 = vmatprep.subr.mxu0 0.0
    %126 = vmatpush1.msra.mxu0 0.0
    %127 = vmatprep.subr.mxu0 0.0
    %128 = vmatpush1.msra.mxu0 0.0
    %129 = vmatprep.subr.mxu0 0.0
    %130 = vmatpush1.msra.mxu0 0.0
    %131 = vmatprep.subr.mxu0 0.0
    %132 = vmatpush1.msra.mxu0 0.0
    %133 = vmatprep.subr.mxu0 0.0
    %134 = vmatpush1.msra.mxu0 0.0
    %135 = vmatprep.subr.mxu0 0.0
    %136 = vmatpush1.msra.mxu0 0.0
    %137 = vmatprep.subr.mxu0 0.0
    %138 = vmatpush1.msra.mxu0 0.0
    %139 = vmatprep.subr.mxu0 0.0
    %140 = vmatpush1.msra.mxu0 0.0
    %141 = vmatprep.subr.mxu0 0.0
    %142 = vmatpush1.msra.mxu0 0.0
    %143 = vmatprep.subr.mxu0 0.0
    %144 = vmatpush1.msra.mxu0 0.0
    %145 = vmatprep.subr.mxu0 0.0
    %146 = vmatpush1.msra.mxu0 0.0
    %147 = vmatprep.subr.mxu0 0.0
    %148 = vmatpush1.msra.mxu0 0.0
    %149 = vmatprep.subr.mxu0 0.0
    %150 = vmatpush1.msra.mxu0 0.0
    %151 = vmatprep.subr.mxu0 0.0
    %152 = vmatpush1.msra.mxu0 0.0
    %153 = vmatprep.subr.mxu0 0.0
    %154 = vmatpush1.msra.mxu0 0.0
    %155 = vmatprep.subr.mxu0 0.0
    %156 = vmatpush1.msra.mxu0 0.0
    %157 = vmatprep.subr.mxu0 0.0
    %158 = vmatpush1.msra.mxu0 0.0
    %159 = vmatprep.subr.mxu0 0.0
    %160 = vmatpush1.msra.mxu0 0.0
    %161 = vmatprep.subr.mxu0 0.0
    %162 = vmatpush1.msra.mxu0 0.0
    %163 = vmatprep.subr.mxu0 0.0
    %164 = vmatpush1.msra.mxu0 0.0
    %165 = vmatprep.subr.mxu0 0.0
    %166 = vmatpush1.msra.mxu0 0.0
    %167 = vmatprep.subr.mxu0 0.0
    %168 = vmatpush1.msra.mxu0 0.0
    %169 = vmatprep.subr.mxu0 0.0
    %170 = vmatpush1.msra.mxu0 0.0
    %171 = vmatprep.subr.mxu0 0.0
    %172 = vmatpush1.msra.mxu0 0.0
    %173 = vmatprep.subr.mxu0 0.0
    %174 = vmatpush1.msra.mxu0 0.0
    %175 = vmatprep.subr.mxu0 0.0
    %176 = vmatpush1.msra.mxu0 0.0
    %177 = vmatprep.mubr.f32.mxu0 0.0
    %178 = vmatmul.mubr.f32.gmra.mrb[0].mxu0 %v40
    %v179 = vpop.f32.mrb[0].mxu0
    %v180 = vadd.f32 %v36, %v179
    %v181 = vpop.f32.mrb[0].mxu0
    %v182 = vadd.f32 %v36, %v181
    %183 = vdwg.mxu0
    %v184 = vmax.f32 %v109, 0.0
    %v185 = vmax.f32 %v111, 0.0
    %v186 = vmax.f32 %v180, 0.0
    %v187 = vmax.f32 %v182, 0.0
    %188 = vset.pattern.permute.xlu0 1
    %189 = vperm.xlu0 %188, %v32
    %v190 = vpop.permute.xlu0 %189
    %v192 = vmul.f32 %v184, %v190
    %v193 = vmul.f32 %v185, %v190
    %v194 = vmul.f32 %v186, %v190
    %v195 = vmul.f32 %v187, %v190
    %vm196 = vcmask 1041408
    %v197 = vsel %vm196, %v192, 0.0
    %v198 = vrot.slane %v197, 4
    %v199 = vadd.f32 %v197, %v198
    %v200 = vrot.slane %v199, 2
    %v201 = vadd.f32 %v199, %v200
    %v202 = vrot.slane %v201, 1
    %v203 = vadd.f32 %v201, %v202
    %v204 = vsel %vm196, %v193, 0.0
    %v205 = vrot.slane %v204, 4
    %v206 = vadd.f32 %v204, %v205
    %v207 = vrot.slane %v206, 2
    %v208 = vadd.f32 %v206, %v207
    %v209 = vrot.slane %v208, 1
    %v210 = vadd.f32 %v208, %v209
    %v211 = vsel %vm196, %v194, 0.0
    %v212 = vrot.slane %v211, 4
    %v213 = vadd.f32 %v211, %v212
    %v214 = vrot.slane %v213, 2
    %v215 = vadd.f32 %v213, %v214
    %v216 = vrot.slane %v215, 1
    %v217 = vadd.f32 %v215, %v216
    %v218 = vsel %vm196, %v195, 0.0
    %v219 = vrot.slane %v218, 4
    %v220 = vadd.f32 %v218, %v219
    %v221 = vrot.slane %v220, 2
    %v222 = vadd.f32 %v220, %v221
    %v223 = vrot.slane %v222, 1
    %v224 = vadd.f32 %v222, %v223
    %225 = vset.pattern.permute.xlu0 2
    %226 = vperm.xlu0 %225, %v32
    %v227 = vpop.permute.xlu0 %226
    %v229 = vadd.f32 %v203, %v227
    %v230 = vadd.f32 %v210, %v227
    %v231 = vadd.f32 %v217, %v227
    %v232 = vadd.f32 %v224, %v227
    %v233 = vxor.u32 %v229, 2147483648
    %v234 = vxor.u32 %v230, 2147483648
    %v235 = vxor.u32 %v231, 2147483648
    %v236 = vxor.u32 %v232, 2147483648
    %v237 = vmul.f32 %v233, 1.442695
    %v238 = vpow.pop %v237
    %v239 = vmul.f32 %v234, 1.442695
    %v240 = vpow.pop %v239
    %v241 = vmul.f32 %v235, 1.442695
    %v242 = vpow.pop %v241
    %v243 = vmul.f32 %v236, 1.442695
    %v244 = vpow.pop %v243
    %v245 = vadd.f32 %v238, 1.0
    %v246 = vadd.f32 %v240, 1.0
    %v247 = vadd.f32 %v242, 1.0
    %v248 = vadd.f32 %v244, 1.0
    %v249 = vrcp.pop %v245
    %v250 = vmul.f32 1.0, %v249
    %v251 = vrcp.pop %v246
    %v252 = vmul.f32 1.0, %v251
    %v253 = vrcp.pop %v247
    %v254 = vmul.f32 1.0, %v253
    %v255 = vrcp.pop %v248
    %v256 = vmul.f32 1.0, %v255
    %v257 = vlaneseq
    %v258 = vshrl.u32 %v257, 7
    %v259 = vsub.s32 0, %v258
    %v260 = vrot.slane %v250, %v259
    %v261 = vlaneseq
    %v262 = vshrl.u32 %v261, 7
    %v263 = vsub.s32 0, %v262
    %v264 = vrot.slane %v252, %v263
    %v265 = vlaneseq
    %v266 = vshrl.u32 %v265, 7
    %v267 = vsub.s32 0, %v266
    %v268 = vrot.slane %v254, %v267
    %v269 = vlaneseq
    %v270 = vshrl.u32 %v269, 7
    %v271 = vsub.s32 0, %v270
    %v272 = vrot.slane %v256, %v271
    %v273 = vmul.f32 %v27, %v260
    %v274 = vmul.f32 %v28, %v264
    %v275 = vmul.f32 %v29, %v268
    %v276 = vmul.f32 %v30, %v272
    %v281 = vcombine.high %v273, %v274
    %v282 = vcombine.high %v275, %v276
    %285 = vst [vmem:[#allocation5] sm:$0xff] %v281
    %286 = vst [vmem:[#allocation5 + $0x8] sm:$0xff] %v282
    // Predicated region
    $region18: #{tpu_custom_call.1} parent=1 // pred_check
      _
    $region19: #{tpu_custom_call.1} parent=1 // pred_check_branch
      %288 = sbr.rel (0) target = $region21
    $region20: #{tpu_custom_call.1} parent=1 // pred_region
      %s290 = ssub.s32 256, 256
      %291 = vsyncadd [#allocation4], %s290
      %s293 = sshll.u32 [#allocation5], 4
      %s294 = int_to_ptr.vmem [resolvable:$true] %s293
      %296 = dma.vmem_to_hbm [thread:$0]  %s294, 256, %s3, [#allocation4]
    $region21: #{tpu_custom_call.1} parent=1 // pred_fallthru
      _
    // Predicated region
    $region22: #{tpu_custom_call.1} parent=1 // pred_check
      _
    $region23: #{tpu_custom_call.1} parent=1 // pred_check_branch
      %298 = sbr.rel (0) target = $region25
    $region24: #{tpu_custom_call.1} parent=1 // pred_region
      %299 = dma.done [#allocation4], 256
    $region25: #{tpu_custom_call.1} parent=1 // pred_fallthru
      _
    %300 = vsyncpa [#allocation3], 1
    %301 = vsyncpa [#allocation4], 1

</llo_original>
